<compile_context>
chip_gen: v7x
topology: tpu7x:2x2x1
jax: 0.10.0
libtpu: 0.0.40
codegen_flags: <defaults>
</compile_context>

<pallas_src>
import functools

import jax
import jax.numpy as jnp
from jax.experimental import pallas as pl
from jax.experimental.pallas import tpu as pltpu


def _pool_fc_kernel(vol_ref, w_ref, b_ref, out_ref, acc_ref, *, valid_rem):
    # vol_ref: (tB, C, tS)   spatial tile of the current batch block
    # w_ref:   (C, N)        folded (proj @ fc) * (1/S)  -- VMEM resident
    # b_ref:   (1, N)        folded bias                 -- VMEM resident
    # out_ref: (1, tB, N)    logits for this batch block
    # acc_ref: (tB, C) f32   per-channel running sum (scratch)
    s = pl.program_id(1)
    n_s = pl.num_programs(1)

    @pl.when(s == 0)
    def _init():
        acc_ref[...] = jnp.zeros_like(acc_ref)

    if valid_rem == 0:
        # tS divides S exactly: every tile is fully valid, no masking.
        acc_ref[...] += jnp.sum(vol_ref[...].astype(jnp.float32), axis=-1)
    else:
        # Ragged last tile: Pallas does not guarantee zero-fill of OOB lanes,
        # so mask them before accumulating (last tile only).
        @pl.when(s != n_s - 1)
        def _full_tile():
            acc_ref[...] += jnp.sum(vol_ref[...].astype(jnp.float32), axis=-1)

        @pl.when(s == n_s - 1)
        def _ragged_tile():
            x = vol_ref[...].astype(jnp.float32)
            lane = jax.lax.broadcasted_iota(jnp.int32, x.shape, 2)
            x = jnp.where(lane < valid_rem, x, 0.0)
            acc_ref[...] += jnp.sum(x, axis=-1)

    @pl.when(s == n_s - 1)
    def _finalize():
        # One (tB, C) @ (C, N) MXU GEMM per batch block; 1/S already folded
        # into w, so acc (a raw sum) is consumed directly.
        logits = jnp.dot(acc_ref[...], w_ref[...],
                         preferred_element_type=jnp.float32)      # (tB, N)
        out_ref[0] = logits + b_ref[...]


def classifier_head(volume, w_proj_t, b_proj, w_fc_t, b_fc,
                    *, tile_s=2048, max_tile_b=8):
    """volume: (B, C, D, H, W); weights pre-transposed to (in, out) layout.

    tile_s: requested lane tile along the flattened spatial axis (rounded to a
    multiple of 128 and clamped so the double-buffered streaming block stays
    within ~16 MiB).  Pass a bf16 volume to halve HBM traffic; accumulation is
    always f32.
    """
    B, C, D, H, W = volume.shape
    S = D * H * W
    N = w_fc_t.shape[1]

    # Fold pool -> proj -> fc (all affine) and the 1/S mean scale:
    #   logits = sum_s(vol) @ ((Wp^T @ Wf^T) / S) + (bp @ Wf^T + bf)
    inv_s = 1.0 / float(S)
    w_comb = (jnp.asarray(w_proj_t, jnp.float32)
              @ jnp.asarray(w_fc_t, jnp.float32)) * inv_s          # (C, N)
    b_comb = (jnp.asarray(b_proj, jnp.float32)
              @ jnp.asarray(w_fc_t, jnp.float32)
              + jnp.asarray(b_fc, jnp.float32)).reshape(1, N)      # (1, N)

    vol = volume.reshape(B, C, S)   # free contiguous view, no copy

    # Batch block: largest divisor of B up to max_tile_b (amortizes per-step
    # overhead, gives the finalize GEMM a real M).
    tB = 1
    for d in range(1, min(B, max_tile_b) + 1):
        if B % d == 0:
            tB = d
    nB = B // tB

    # Spatial lane tile: multiple of 128, clamped so 2 * tB * C * tS * itemsize
    # (the double-buffered streaming block) stays <= ~16 MiB.
    itemsize = vol.dtype.itemsize
    s_ceil = ((S + 127) // 128) * 128
    tS = max(128, (min(int(tile_s), s_ceil) // 128) * 128)
    max_ts = max(128, ((16 * 2**20) // (2 * tB * C * itemsize)) // 128 * 128)
    tS = min(tS, max_ts)
    n_tiles = pl.cdiv(S, tS)
    valid_rem = S % tS   # 0 => every tile full; else valid lanes in last tile

    kernel = functools.partial(_pool_fc_kernel, valid_rem=valid_rem)

    # Explicit scoped-VMEM budget (v5e default is only 16 MiB).
    est = (2 * tB * C * tS * itemsize          # double-buffered input stream
           + tB * C * 4                        # accumulator
           + (C * N + N) * 4                   # resident weights/bias
           + 2 * tB * N * 4                    # output block
           + 8 * 2**20)                        # compiler slack
    vmem_limit = int(min(48 * 2**20, max(32 * 2**20, est)))

    out = pl.pallas_call(
        kernel,
        out_shape=jax.ShapeDtypeStruct((nB, tB, N), jnp.float32),
        grid=(nB, n_tiles),
        in_specs=[
            pl.BlockSpec((tB, C, tS), lambda b, s: (b, 0, s)),
            # Constant operands: whole-array VMEM residents (DMA'd once, not
            # pipelined/double-buffered).
            pl.BlockSpec(memory_space=pltpu.MemorySpace.VMEM),
            pl.BlockSpec(memory_space=pltpu.MemorySpace.VMEM),
        ],
        out_specs=pl.BlockSpec((1, tB, N), lambda b, s: (b, 0, 0)),
        scratch_shapes=[pltpu.VMEM((tB, C), jnp.float32)],
        compiler_params=pltpu.CompilerParams(
            dimension_semantics=("parallel", "arbitrary"),
            vmem_limit_bytes=vmem_limit),
    )(vol, w_comb, b_comb)

    return out.reshape(B, N)


if __name__ == "__main__":
    # Small shapes consistent with a 3D-volume classifier.
    # S = 6*8*8 = 384.
    B, C, D, H, W = 2, 4, 6, 8, 8
    embed_dim = 32
    num_classes = 10

    key = jax.random.PRNGKey(0)
    k_vol, k_wp, k_bp, k_wf, k_bf = jax.random.split(key, 5)

    volume = jax.random.normal(k_vol, (B, C, D, H, W), dtype=jnp.float32)

    # frozen backbone projection params (PyTorch nn.Linear-style init)
    bound_p = 1.0 / jnp.sqrt(C)
    w_proj = jax.random.uniform(k_wp, (embed_dim, C), jnp.float32,
                                -bound_p, bound_p)           # (out, in)
    b_proj = jax.random.uniform(k_bp, (embed_dim,), jnp.float32,
                                -bound_p, bound_p)

    # classifier head: nn.Linear(embed_dim, num_classes)
    bound_f = 1.0 / jnp.sqrt(embed_dim)
    w_fc = jax.random.uniform(k_wf, (num_classes, embed_dim), jnp.float32,
                              -bound_f, bound_f)              # (out, in)
    b_fc = jax.random.uniform(k_bf, (num_classes,), jnp.float32,
                              -bound_f, bound_f)

    # pure-JAX reference (un-fused two-layer math)
    emb_ref = jnp.mean(volume.reshape(B, C, -1), axis=-1) @ w_proj.T + b_proj
    logits_ref = emb_ref @ w_fc.T + b_fc

    # Path 1: ragged last tile (tS=256 over S=384 -> masked tail in-kernel).
    logits_a = classifier_head(volume, w_proj.T, b_proj, w_fc.T, b_fc,
                               tile_s=256)
    logits_a = jax.block_until_ready(logits_a)
    assert logits_a.shape == (B, num_classes)
    assert jnp.allclose(logits_a, logits_ref, atol=1e-5, rtol=1e-5)

    # Path 2: default tile (single full tile, unmasked fast path).
    logits_b = classifier_head(volume, w_proj.T, b_proj, w_fc.T, b_fc)
    logits_b = jax.block_until_ready(logits_b)
    assert jnp.allclose(logits_b, logits_ref, atol=1e-5, rtol=1e-5)

    print("KERNEL_OK")
</pallas_src>

<mosaic_0001>
module attributes {stable_mosaic.version = 11 : i64} {
  func.func @_pool_fc_kernel(%arg0: i32, %arg1: i32, %arg2: memref<2x4x256xf32, #tpu.memory_space<vmem>>, %arg3: memref<4x10xf32, #tpu.memory_space<vmem>>, %arg4: memref<1x10xf32, #tpu.memory_space<vmem>>, %arg5: memref<1x2x10xf32, #tpu.memory_space<vmem>>, %arg6: memref<2x4xf32, #tpu.memory_space<vmem>>) attributes {dimension_semantics = [#tpu.dimension_semantics<parallel>, #tpu.dimension_semantics<arbitrary>], iteration_bounds = array<i64: 1, 2>, scalar_prefetch = 0 : i64, scratch_operands = 1 : i64, tpu.core_type = #tpu.core_type<tc>, window_params = [{transform_indices = @transform_0, window_bounds = array<i64: 2, 4, 256>}, {pipeline_mode = #tpu.pipeline_mode<synchronous>, transform_indices = @transform_1, window_bounds = array<i64: 4, 10>}, {pipeline_mode = #tpu.pipeline_mode<synchronous>, transform_indices = @transform_2, window_bounds = array<i64: 1, 10>}, {transform_indices = @transform_3, window_bounds = array<i64: 1, 2, 10>}]} {
    %c0_i32 = arith.constant 0 : i32
    %0 = arith.cmpi eq, %arg1, %c0_i32 : i32
    %1 = arith.extui %0 : i1 to i32
    %c0_i32_0 = arith.constant 0 : i32
    %2 = arith.cmpi ne, %1, %c0_i32_0 : i32
    scf.if %2 {
      %cst = arith.constant 0.000000e+00 : f32
      %12 = vector.broadcast %cst : f32 to vector<2x4xf32>
      %c0 = arith.constant 0 : index
      %c0_6 = arith.constant 0 : index
      %13 = vector.load %arg6[%c0, %c0_6] : memref<2x4xf32, #tpu.memory_space<vmem>>, vector<2x4xf32>
      tpu.vector_store %arg6[%c0, %c0_6], %12 {strides = array<i32>} : memref<2x4xf32, #tpu.memory_space<vmem>>, vector<2x4xf32>,
    } else {
    }
    %c1_i32 = arith.constant 1 : i32
    %3 = arith.cmpi ne, %arg1, %c1_i32 : i32
    %4 = arith.extui %3 : i1 to i32
    %c0_i32_1 = arith.constant 0 : i32
    %5 = arith.cmpi ne, %4, %c0_i32_1 : i32
    scf.if %5 {
      %c0 = arith.constant 0 : index
      %c0_6 = arith.constant 0 : index
      %12 = vector.load %arg6[%c0, %c0_6] : memref<2x4xf32, #tpu.memory_space<vmem>>, vector<2x4xf32>
      %c0_7 = arith.constant 0 : index
      %c0_8 = arith.constant 0 : index
      %c0_9 = arith.constant 0 : index
      %13 = vector.load %arg2[%c0_7, %c0_8, %c0_9] : memref<2x4x256xf32, #tpu.memory_space<vmem>>, vector<2x4x256xf32>
      %cst = arith.constant dense<0.000000e+00> : vector<2x4xf32>
      %14 = vector.multi_reduction <add>, %13, %cst [2] : vector<2x4x256xf32> to vector<2x4xf32>
      %15 = arith.addf %12, %14 : vector<2x4xf32>
      %c0_10 = arith.constant 0 : index
      %c0_11 = arith.constant 0 : index
      %16 = vector.load %arg6[%c0_10, %c0_11] : memref<2x4xf32, #tpu.memory_space<vmem>>, vector<2x4xf32>
      tpu.vector_store %arg6[%c0_10, %c0_11], %15 {strides = array<i32>} : memref<2x4xf32, #tpu.memory_space<vmem>>, vector<2x4xf32>,
    } else {
    }
    %c1_i32_2 = arith.constant 1 : i32
    %6 = arith.cmpi eq, %arg1, %c1_i32_2 : i32
    %7 = arith.extui %6 : i1 to i32
    %c0_i32_3 = arith.constant 0 : i32
    %8 = arith.cmpi ne, %7, %c0_i32_3 : i32
    scf.if %8 {
      %c0 = arith.constant 0 : index
      %c0_6 = arith.constant 0 : index
      %c0_7 = arith.constant 0 : index
      %12 = vector.load %arg2[%c0, %c0_6, %c0_7] : memref<2x4x256xf32, #tpu.memory_space<vmem>>, vector<2x4x256xf32>
      %13 = tpu.iota {dimensions = array<i32: 2>} : vector<2x4x256xi32>
      %c128_i32 = arith.constant 128 : i32
      %14 = vector.broadcast %c128_i32 : i32 to vector<2x4x256xi32>
      %15 = arith.cmpi slt, %13, %14 : vector<2x4x256xi32>
      %cst = arith.constant 0.000000e+00 : f32
      %16 = vector.broadcast %cst : f32 to vector<2x4x256xf32>
      %17 = arith.select %15, %12, %16 : vector<2x4x256xi1>, vector<2x4x256xf32>
      %c0_8 = arith.constant 0 : index
      %c0_9 = arith.constant 0 : index
      %18 = vector.load %arg6[%c0_8, %c0_9] : memref<2x4xf32, #tpu.memory_space<vmem>>, vector<2x4xf32>
      %cst_10 = arith.constant dense<0.000000e+00> : vector<2x4xf32>
      %19 = vector.multi_reduction <add>, %17, %cst_10 [2] : vector<2x4x256xf32> to vector<2x4xf32>
      %20 = arith.addf %18, %19 : vector<2x4xf32>
      %c0_11 = arith.constant 0 : index
      %c0_12 = arith.constant 0 : index
      %21 = vector.load %arg6[%c0_11, %c0_12] : memref<2x4xf32, #tpu.memory_space<vmem>>, vector<2x4xf32>
      tpu.vector_store %arg6[%c0_11, %c0_12], %20 {strides = array<i32>} : memref<2x4xf32, #tpu.memory_space<vmem>>, vector<2x4xf32>,
    } else {
    }
    %c1_i32_4 = arith.constant 1 : i32
    %9 = arith.cmpi eq, %arg1, %c1_i32_4 : i32
    %10 = arith.extui %9 : i1 to i32
    %c0_i32_5 = arith.constant 0 : i32
    %11 = arith.cmpi ne, %10, %c0_i32_5 : i32
    scf.if %11 {
      %c0 = arith.constant 0 : index
      %c0_6 = arith.constant 0 : index
      %12 = vector.load %arg6[%c0, %c0_6] : memref<2x4xf32, #tpu.memory_space<vmem>>, vector<2x4xf32>
      %c0_7 = arith.constant 0 : index
      %c0_8 = arith.constant 0 : index
      %13 = vector.load %arg3[%c0_7, %c0_8] : memref<4x10xf32, #tpu.memory_space<vmem>>, vector<4x10xf32>
      %cst = arith.constant dense<0.000000e+00> : vector<2x10xf32>
      %14 = tpu.matmul %12, %13, %cst {dimension_numbers = #tpu.dot_dimension_numbers<[1], [0], [0], [1], [0, 0, 1, 1], [], []>} : vector<2x4xf32>, vector<4x10xf32>, vector<2x10xf32> -> vector<2x10xf32>
      %c0_9 = arith.constant 0 : index
      %c0_10 = arith.constant 0 : index
      %15 = vector.load %arg4[%c0_9, %c0_10] : memref<1x10xf32, #tpu.memory_space<vmem>>, vector<1x10xf32>
      %16 = vector.broadcast %15 : vector<1x10xf32> to vector<2x10xf32>
      %17 = arith.addf %14, %16 : vector<2x10xf32>
      %c0_11 = arith.constant 0 : index
      %c0_12 = arith.constant 0 : index
      %c0_13 = arith.constant 0 : index
      %18 = vector.load %arg5[%c0_11, %c0_12, %c0_13] : memref<1x2x10xf32, #tpu.memory_space<vmem>>, vector<1x2x10xf32>
      %19 = vector.shape_cast %18 : vector<1x2x10xf32> to vector<2x10xf32>
      %20 = vector.shape_cast %17 : vector<2x10xf32> to vector<1x2x10xf32>
      tpu.vector_store %arg5[%c0_11, %c0_12, %c0_13], %20 {strides = array<i32>} : memref<1x2x10xf32, #tpu.memory_space<vmem>>, vector<1x2x10xf32>,
    } else {
    }
    return
  }
  func.func @transform_0(%arg0: i32, %arg1: i32) -> (i32, i32, i32) {
    %c0_i32 = arith.constant 0 : i32
    %c0_i32_0 = arith.constant 0 : i32
    return %arg0, %c0_i32, %arg1 : i32, i32, i32
  }
  func.func @transform_1(%arg0: i32, %arg1: i32) -> (i32, i32) {
    %c0_i32 = arith.constant 0 : i32
    %c0_i32_0 = arith.constant 0 : i32
    %c0_i32_1 = arith.constant 0 : i32
    return %c0_i32, %c0_i32_0 : i32, i32
  }
  func.func @transform_2(%arg0: i32, %arg1: i32) -> (i32, i32) {
    %c0_i32 = arith.constant 0 : i32
    %c0_i32_0 = arith.constant 0 : i32
    %c0_i32_1 = arith.constant 0 : i32
    return %c0_i32, %c0_i32_0 : i32, i32
  }
  func.func @transform_3(%arg0: i32, %arg1: i32) -> (i32, i32, i32) {
    %c0_i32 = arith.constant 0 : i32
    %c0_i32_0 = arith.constant 0 : i32
    %c0_i32_1 = arith.constant 0 : i32
    return %arg0, %c0_i32, %c0_i32_0 : i32, i32, i32
  }
}

</mosaic_0001>

<llo_original>
// kernel: tpu_custom_call.1
$region0: #{tpu_custom_call.1}
  #allocation0 [shape = 'u32[]', space=smem, size = 0x4, offset = 0x4, fixed_abs, tag = 'smem constant byte address 0x4 - core index']
  #allocation1 [shape = 'u32[144,128]{1,0:T(1,128)}', space=vmem, size = 0x12000, scoped, tag = 'internal scratch']
  #allocation2 [shape = 'f32[2,4]{1,0:T(2,128)}', space=vmem, size = 0x400, scoped, tag = 'scratch operand']
  %s0 = inlined_call_operand.hbm [shape: f32[2,4,384], index: 0, kind: input, shape index: {}]
  %s1 = inlined_call_operand.hbm [shape: f32[4,10], index: 1, kind: input, shape index: {}]
  %s2 = inlined_call_operand.vmem [shape: f32[1,10], index: 2, kind: input, shape index: {}]
  %s3 = inlined_call_operand.hbm [shape: f32[1,2,10], index: 3, kind: output, shape index: {}]
  %s4 = sld [smem:[#allocation0]]
  $region65: #{tpu_custom_call.1} parent=0
    _
  %s6 = ssub.s32 1, %s4
  %s7 = scalar_select 0, %s6, %s4
  $region1: #{tpu_custom_call.1} parent=0
    #allocation3 [shape = 'u8[16384]{0}', space=vmem, size = 0x4000, scoped, tag = 'input window, operand 0']
    #allocation4 [shape = 's32[2]{0}', space=sflag, size = 0x8, scoped, tag = 'scoped memory for tpu_custom_call.1']
    #allocation5 [shape = 's32[2]{0}', space=sflag, size = 0x8, scoped, tag = 'scoped memory for tpu_custom_call.1']
    #allocation6 [shape = 'u8[2048]{0}', space=vmem, size = 0x800, scoped, tag = 'input window, operand 1, single buffered']
    #allocation7 [shape = 's32[1]{0}', space=sflag, size = 0x4, scoped, tag = 'scoped memory for tpu_custom_call.1']
    #allocation8 [shape = 'u8[1024]{0}', space=vmem, size = 0x400, scoped, tag = 'output window, operand 0, single buffered']
    %8 = vsyncpa [#allocation4], 0
    %s9 = scalar_lea.sflag [#allocation4], 1
    %10 = vsyncpa %s9, 0
    %11 = vsyncpa [#allocation7], 0
    %12 = vsyncpa [#allocation5], 0
    loop: start=0, step=1, limit=4
    $region2: #{tpu_custom_call.1} parent=1 // loop_pre_header
      _
    $region3: #{tpu_custom_call.1} parent=1 // loop_header
      %s14 = sphi 0, %s18
      %p15 = scmp.ge.s32.totalorder %s14, 4
      %s21 = sphi 0, %s33
      %s22 = sphi 0, %s29
      %s23 = sphi 0, %s21
      %s24 = sphi 0, %s22
      %s25 = sphi 0, %s23
      %s26 = sphi 0, %s24
      %s38 = sphi 0, %s40
      %s41 = sphi 0, %s38
      %s42 = sphi 0, %s41
      %s58 = sphi 0, %s42
      %s62 = sphi 0, %s62
      %s64 = sphi 0, %s62
      %s65 = sphi 0, %s64
      %s79 = sphi 0, %s65
      %s83 = sphi 0, %s83
      %s85 = sphi 0, %s83
      %s86 = sphi 0, %s85
      %s100 = sphi 0, %s86
      %s106 = sphi 0, %s108
      %s109 = sphi 0, %s106
      %s110 = sphi 0, %s109
      %s126 = sphi 0, %s110
    $region4: #{tpu_custom_call.1} parent=1 // loop_header_branch
      %17 = sbr.rel (%p15) target = $region8
    $region5: #{tpu_custom_call.1} parent=1 // loop_body
      %s19 = ssub.s32 %s14, 1
      %s20 = ssub.s32 %s14, 2
      %s27 = sadd.s32 1, %s22
      %p28 = scmp.ge.s32.totalorder %s27, 2
      %s29 = scalar_select %p28, 0, %s27
      %s30 = sadd.s32 1, %s21
      %s31 = scalar_select %p28, %s30, %s21
      %p32 = scmp.ge.s32.totalorder %s31, 1
      %s33 = scalar_select %p32, 0, %s31
      %s34 = ssub.s32 %s21, %s33
      %s35 = ssub.s32 %s22, %s29
      %s36 = sor.u32 %s34, %s35
      %p37 = scmp.eq.s32.totalorder %s36, 0
      %s39 = sadd.s32 %s38, 1
      %s40 = scalar_select %p37, %s38, %s39
      %p43 = pneg %p37
      %p44 = scmp.eq.s32.totalorder %s14, 1
      %p45 = por %p43, %p44
      %p46 = scmp.ne.s32.totalorder %s38, %s41
      %p47 = scmp.eq.s32.totalorder %s14, 0
      %p48 = por %p46, %p47
      %p49 = scmp.ne.s32.totalorder %s38, %s41
      %p50 = scmp.eq.s32.totalorder %s19, 1
      %p51 = por %p49, %p50
      %p52 = scmp.ne.s32.totalorder %s41, %s42
      %p53 = scmp.eq.s32.totalorder %s19, 0
      %p54 = por %p52, %p53
      %p55 = scmp.ne.s32.totalorder %s41, %s42
      %p56 = scmp.eq.s32.totalorder %s20, 1
      %p57 = por %p55, %p56
      %p59 = scmp.ne.s32.totalorder %s42, %s58
      %p60 = scmp.eq.s32.totalorder %s20, 0
      %p61 = por %p59, %p60
      %s63 = sadd.s32 %s62, 1
      %p66 = scmp.eq.s32.totalorder %s14, 1
      %p67 = scmp.ne.s32.totalorder %s62, %s64
      %p68 = scmp.eq.s32.totalorder %s14, 0
      %p69 = por %p67, %p68
      %p70 = scmp.ne.s32.totalorder %s62, %s64
      %p71 = scmp.eq.s32.totalorder %s19, 1
      %p72 = por %p70, %p71
      %p73 = scmp.ne.s32.totalorder %s64, %s65
      %p74 = scmp.eq.s32.totalorder %s19, 0
      %p75 = por %p73, %p74
      %p76 = scmp.ne.s32.totalorder %s64, %s65
      %p77 = scmp.eq.s32.totalorder %s20, 1
      %p78 = por %p76, %p77
      %p80 = scmp.ne.s32.totalorder %s65, %s79
      %p81 = scmp.eq.s32.totalorder %s20, 0
      %p82 = por %p80, %p81
      %s84 = sadd.s32 %s83, 1
      %p87 = scmp.eq.s32.totalorder %s14, 1
      %p88 = scmp.ne.s32.totalorder %s83, %s85
      %p89 = scmp.eq.s32.totalorder %s14, 0
      %p90 = por %p88, %p89
      %p91 = scmp.ne.s32.totalorder %s83, %s85
      %p92 = scmp.eq.s32.totalorder %s19, 1
      %p93 = por %p91, %p92
      %p94 = scmp.ne.s32.totalorder %s85, %s86
      %p95 = scmp.eq.s32.totalorder %s19, 0
      %p96 = por %p94, %p95
      %p97 = scmp.ne.s32.totalorder %s85, %s86
      %p98 = scmp.eq.s32.totalorder %s20, 1
      %p99 = por %p97, %p98
      %p101 = scmp.ne.s32.totalorder %s86, %s100
      %p102 = scmp.eq.s32.totalorder %s20, 0
      %p103 = por %p101, %p102
      %s104 = ssub.s32 %s21, %s33
      %p105 = scmp.eq.s32.totalorder %s104, 0
      %s107 = sadd.s32 %s106, 1
      %s108 = scalar_select %p105, %s106, %s107
      %p111 = pneg %p105
      %p112 = scmp.eq.s32.totalorder %s14, 1
      %p113 = por %p111, %p112
      %p114 = scmp.ne.s32.totalorder %s106, %s109
      %p115 = scmp.eq.s32.totalorder %s14, 0
      %p116 = por %p114, %p115
      %p117 = scmp.ne.s32.totalorder %s106, %s109
      %p118 = scmp.eq.s32.totalorder %s19, 1
      %p119 = por %p117, %p118
      %p120 = scmp.ne.s32.totalorder %s109, %s110
      %p121 = scmp.eq.s32.totalorder %s19, 0
      %p122 = por %p120, %p121
      %p123 = scmp.ne.s32.totalorder %s109, %s110
      %p124 = scmp.eq.s32.totalorder %s20, 1
      %p125 = por %p123, %p124
      %p127 = scmp.ne.s32.totalorder %s110, %s126
      %p128 = scmp.eq.s32.totalorder %s20, 0
      %p129 = por %p127, %p128
      %p130 = scmp.le.s32.totalorder 1, %s14
      %p131 = scmp.lt.s32.totalorder %s14, 3
      %p132 = pnand %p130, %p131
      %p133 = pneg %p132
      // Predicated region
      $region9: #{tpu_custom_call.1} parent=5 // pred_check
        _
      $region10: #{tpu_custom_call.1} parent=5 // pred_check_branch
        %135 = sbr.rel (%p132) target = $region12
      $region11: #{tpu_custom_call.1} parent=5 // pred_region
        %s136 = ssub.s32 %s14, 1
        // Predicated region
        $region13: #{tpu_custom_call.1} parent=11 // pred_check
          %p137 = pneg %p75
        $region14: #{tpu_custom_call.1} parent=11 // pred_check_branch
          %139 = sbr.rel (%p137) target = $region16
        $region15: #{tpu_custom_call.1} parent=11 // pred_region
          %s141 = ssub.s32 64, 64
          %142 = vsyncadd [#allocation7], %s141
          %s144 = sshll.u32 [#allocation6], 4
          %s145 = int_to_ptr.vmem [resolvable:$true] %s144
          %147 = dma.hbm_to_vmem [thread:$0]  %s1, 64, %s145, [#allocation7]
        $region16: #{tpu_custom_call.1} parent=11 // pred_fallthru
          _
        // Predicated region
        $region17: #{tpu_custom_call.1} parent=11 // pred_check
          %p148 = pneg %p96
        $region18: #{tpu_custom_call.1} parent=11 // pred_check_branch
          %150 = sbr.rel (%p148) target = $region20
        $region19: #{tpu_custom_call.1} parent=11 // pred_region
          _
        $region20: #{tpu_custom_call.1} parent=11 // pred_fallthru
          _
      $region12: #{tpu_custom_call.1} parent=5 // pred_fallthru
        _
      %p151 = scmp.lt.s32.totalorder %s14, 2
      // Predicated region
      $region21: #{tpu_custom_call.1} parent=5 // pred_check
        %p152 = pneg %p151
      $region22: #{tpu_custom_call.1} parent=5 // pred_check_branch
        %154 = sbr.rel (%p152) target = $region24
      $region23: #{tpu_custom_call.1} parent=5 // pred_region
        // Predicated region
        $region25: #{tpu_custom_call.1} parent=23 // pred_check
          %p155 = pneg %p48
        $region26: #{tpu_custom_call.1} parent=23 // pred_check_branch
          %157 = sbr.rel (%p155) target = $region28
        $region27: #{tpu_custom_call.1} parent=23 // pred_region
          %s158 = sand.u32 %s38, 1
          %s159 = scalar_lea.sflag [#allocation4], %s158
          %s160 = sand.u32 %s38, 1
          %s161 = smul.addr %s160, 16
          %s162 = scalar_lea.vmem [#allocation3], %s161
          %s163 = smul.u32 2, %s21
          %s164 = smul.u32 2, %s22
          %s165 = ssub.s32 3, %s164
          %p166 = scmp.lt.s32.totalorder %s165, 2
          %s167 = scalar_select %p166, %s165, 2
          %s168 = smul.u32 128, %s167
          %s170 = ssub.s32 256, %s168
          %171 = vsyncadd %s159, %s170
          %p172 = scmp.ne.s32.totalorder 0, %s168
          %s173 = smul.addr %s163, 3
          %s174 = sadd.s32 %s164, %s173
          %s175 = smul.addr %s174, 64
          %s176 = scalar_lea.hbm %s0, %s175
          %s177 = smul.u32 %s167, 4
          %s178 = smul.u32 %s177, 2
          %s179 = sshll.u32 %s162, 4
          %s180 = int_to_ptr.vmem [resolvable:$true] %s179
          %s181 = sshll.u32 %s178, 4
          %185 = dma.hbm_to_vmem [thread:$0]  (%p172), %s176, %s181, %s180, %s159, 192, 128, %s177
        $region28: #{tpu_custom_call.1} parent=23 // pred_fallthru
          _
      $region24: #{tpu_custom_call.1} parent=5 // pred_fallthru
        _
      %p186 = scmp.le.s32.totalorder 1, %s14
      %p187 = scmp.lt.s32.totalorder %s14, 3
      %p188 = pnand %p186, %p187
      %p189 = pneg %p188
      // Predicated region
      $region29: #{tpu_custom_call.1} parent=5 // pred_check
        _
      $region30: #{tpu_custom_call.1} parent=5 // pred_check_branch
        %191 = sbr.rel (%p188) target = $region32
      $region31: #{tpu_custom_call.1} parent=5 // pred_region
        %s192 = ssub.s32 %s14, 1
        %s193 = sand.u32 %s41, 1
        %s194 = scalar_lea.sflag [#allocation4], %s193
        %s195 = sand.u32 %s41, 1
        %s196 = smul.addr %s195, 16
        %s197 = scalar_lea.vmem [#allocation3], %s196
        // Predicated region
        $region33: #{tpu_custom_call.1} parent=31 // pred_check
          %p198 = pneg %p54
        $region34: #{tpu_custom_call.1} parent=31 // pred_check_branch
          %200 = sbr.rel (%p198) target = $region36
        $region35: #{tpu_custom_call.1} parent=31 // pred_region
          %201 = dma.done %s194, 256
        $region36: #{tpu_custom_call.1} parent=31 // pred_fallthru
          _
        // Predicated region
        $region37: #{tpu_custom_call.1} parent=31 // pred_check
          %p202 = pneg %p75
        $region38: #{tpu_custom_call.1} parent=31 // pred_check_branch
          %204 = sbr.rel (%p202) target = $region40
        $region39: #{tpu_custom_call.1} parent=31 // pred_region
          %205 = dma.done [#allocation7], 64
        $region40: #{tpu_custom_call.1} parent=31 // pred_fallthru
          _
        %s206 = sand.u32 %s41, 1
        %s207 = scalar_lea.sflag [#allocation4], %s206
        %s208 = sand.u32 %s41, 1
        %s209 = smul.addr %s208, 16
        %s210 = scalar_lea.vmem [#allocation3], %s209
        %p211 = pneg %p54
        %p212 = pneg %p51
        %p213 = pneg %p75
        %p214 = pneg %p72
        %p215 = pneg %p96
        %p216 = pneg %p93
        %p217 = pneg %p122
        %p218 = pneg %p119
        %s219 = smul.u32 2, %s23
        %s220 = smul.u32 2, %s24
        %s221 = ssub.s32 3, %s220
        %p222 = scmp.lt.s32.totalorder %s221, 2
        %s223 = scalar_select %p222, %s221, 2
        %s224 = smul.u32 128, %s223
        %p225 = scmp.eq.s32.totalorder %s24, 0
        // Predicated region
        $region41: #{tpu_custom_call.1} parent=31 // pred_check
          %p226 = pneg %p225
        $region42: #{tpu_custom_call.1} parent=31 // pred_check_branch
          %228 = sbr.rel (%p226) target = $region44
        $region43: #{tpu_custom_call.1} parent=31 // pred_region
          %vm229 = vcmask 25600
          %230 = vst.msk [vmem:[#allocation2] sm:$0x3] %vm229, 0.0
        $region44: #{tpu_custom_call.1} parent=31 // pred_fallthru
          _
        %p231 = scmp.ne.s32.totalorder %s24, 1
        // Predicated region
        $region45: #{tpu_custom_call.1} parent=31 // pred_check
          %p232 = pneg %p231
        $region46: #{tpu_custom_call.1} parent=31 // pred_check_branch
          %234 = sbr.rel (%p232) target = $region48
        $region47: #{tpu_custom_call.1} parent=31 // pred_region
          %v235 = vld [vmem:[#allocation2] sm:$0x3]
          %v236 = vld [vmem:[%s197] sm:$0xff]
          %v237 = vld [vmem:[%s197 + $0x8] sm:$0xff]
          %v240 = vcombine.high %v236, %v236
          %v241 = vcombine.high %v237, %v237
          %vm244 = vcmask 1043456
          %v245 = vsel %vm244, %v236, 0.0
          %v246 = vsel %vm244, %v240, 0.0
          %v247 = vadd.f32 %v245, %v246
          %248 = vadd.xlane.f32.xlu0 %v247
          %v249 = vpop.xlane.xlu0 %248
          %v250 = vsel %vm244, %v237, 0.0
          %v251 = vsel %vm244, %v241, 0.0
          %v252 = vadd.f32 %v250, %v251
          %253 = vadd.xlane.f32.xlu0 %v252
          %v254 = vpop.xlane.xlu0 %253
          %v257 = vlaneseq
          %v258 = vand.u32 %v257, 127
          %v259 = vlaneseq
          %v260 = vshrl.u32 %v259, 7
          %v261 = vsub.s32 %v258, %v260
          %v262 = vrot.slane %v249, %v261
          %v263 = vlaneseq
          %v264 = vshrl.u32 %v263, 7
          %v265 = vsub.s32 %v258, %v264
          %v266 = vrot.slane %v254, %v265
          %vm267 = vcmask 1041409
          %v268 = vsel %vm267, %v266, %v262
          %v270 = vadd.f32 %v235, %v268
          %vm271 = vcmask 25600
          %272 = vst.msk [vmem:[#allocation2] sm:$0x3] %vm271, %v270
        $region48: #{tpu_custom_call.1} parent=31 // pred_fallthru
          _
        %p273 = scmp.eq.s32.totalorder %s24, 1
        // Predicated region
        $region49: #{tpu_custom_call.1} parent=31 // pred_check
          %p274 = pneg %p273
        $region50: #{tpu_custom_call.1} parent=31 // pred_check_branch
          %276 = sbr.rel (%p274) target = $region52
        $region51: #{tpu_custom_call.1} parent=31 // pred_region
          %v277 = vld [vmem:[%s197] sm:$0xff]
          %v278 = vld [vmem:[%s197 + $0x8] sm:$0xff]
          %v279 = vlaneseq
          %v280 = vand.u32 %v279, 127
          %v281 = vadd.s32 %v280, 128
          %vm282 = vcmp.lt.s32.totalorder %v280, 128
          %vm283 = vcmp.lt.s32.totalorder %v281, 128
          %v286 = vcombine.high %v277, %v277
          %v287 = vcombine.high %v278, %v278
          %v290 = vsel %vm282, %v277, 0.0
          %v291 = vsel %vm283, %v286, 0.0
          %v292 = vsel %vm282, %v278, 0.0
          %v293 = vsel %vm283, %v287, 0.0
          %v294 = vld [vmem:[#allocation2] sm:$0x3]
          %vm295 = vcmask 1043456
          %v296 = vsel %vm295, %v290, 0.0
          %v297 = vsel %vm295, %v291, 0.0
          %v298 = vadd.f32 %v296, %v297
          %299 = vadd.xlane.f32.xlu0 %v298
          %v300 = vpop.xlane.xlu0 %299
          %v301 = vsel %vm295, %v292, 0.0
          %v302 = vsel %vm295, %v293, 0.0
          %v303 = vadd.f32 %v301, %v302
          %304 = vadd.xlane.f32.xlu0 %v303
          %v305 = vpop.xlane.xlu0 %304
          %v308 = vlaneseq
          %v309 = vshrl.u32 %v308, 7
          %v310 = vsub.s32 %v280, %v309
          %v311 = vrot.slane %v300, %v310
          %v312 = vlaneseq
          %v313 = vshrl.u32 %v312, 7
          %v314 = vsub.s32 %v280, %v313
          %v315 = vrot.slane %v305, %v314
          %vm316 = vcmask 1041409
          %v317 = vsel %vm316, %v315, %v311
          %v319 = vadd.f32 %v294, %v317
          %vm320 = vcmask 25600
          %321 = vst.msk [vmem:[#allocation2] sm:$0x3] %vm320, %v319
          %v322 = vld [vmem:[#allocation2] sm:$0x3]
          %v323 = vld [vmem:[#allocation6] sm:$0xf]
          %v324 = vld [vmem:[%s2] sm:$0x1]
          %v326 = vlaneseq
          %v327 = vshrl.u32 %v326, 7
          %v328 = vsub.s32 0, %v327
          %v329 = vrot.slane %v324, %v328
          %vm331 = vcmask 31744
          %v333 = vsel %vm331, %v322, 0
          %v336 = vsel %vm295, %v323, 0
          %338 = vmatprep.subr.mxu0 0.0
          %339 = vmatpush1.msra.mxu0 %v336
          %340 = vmatprep.subr.mxu0 0.0
          %341 = vmatpush1.msra.mxu0 0.0
          %342 = vmatprep.subr.mxu0 0.0
          %343 = vmatpush1.msra.mxu0 0.0
          %344 = vmatprep.subr.mxu0 0.0
          %345 = vmatpush1.msra.mxu0 0.0
          %346 = vmatprep.subr.mxu0 0.0
          %347 = vmatpush1.msra.mxu0 0.0
          %348 = vmatprep.subr.mxu0 0.0
          %349 = vmatpush1.msra.mxu0 0.0
          %350 = vmatprep.subr.mxu0 0.0
          %351 = vmatpush1.msra.mxu0 0.0
          %352 = vmatprep.subr.mxu0 0.0
          %353 = vmatpush1.msra.mxu0 0.0
          %354 = vmatprep.subr.mxu0 0.0
          %355 = vmatpush1.msra.mxu0 0.0
          %356 = vmatprep.subr.mxu0 0.0
          %357 = vmatpush1.msra.mxu0 0.0
          %358 = vmatprep.subr.mxu0 0.0
          %359 = vmatpush1.msra.mxu0 0.0
          %360 = vmatprep.subr.mxu0 0.0
          %361 = vmatpush1.msra.mxu0 0.0
          %362 = vmatprep.subr.mxu0 0.0
          %363 = vmatpush1.msra.mxu0 0.0
          %364 = vmatprep.subr.mxu0 0.0
          %365 = vmatpush1.msra.mxu0 0.0
          %366 = vmatprep.subr.mxu0 0.0
          %367 = vmatpush1.msra.mxu0 0.0
          %368 = vmatprep.subr.mxu0 0.0
          %369 = vmatpush1.msra.mxu0 0.0
          %370 = vmatprep.subr.mxu0 0.0
          %371 = vmatpush1.msra.mxu0 0.0
          %372 = vmatprep.subr.mxu0 0.0
          %373 = vmatpush1.msra.mxu0 0.0
          %374 = vmatprep.subr.mxu0 0.0
          %375 = vmatpush1.msra.mxu0 0.0
          %376 = vmatprep.subr.mxu0 0.0
          %377 = vmatpush1.msra.mxu0 0.0
          %378 = vmatprep.subr.mxu0 0.0
          %379 = vmatpush1.msra.mxu0 0.0
          %380 = vmatprep.subr.mxu0 0.0
          %381 = vmatpush1.msra.mxu0 0.0
          %382 = vmatprep.subr.mxu0 0.0
          %383 = vmatpush1.msra.mxu0 0.0
          %384 = vmatprep.subr.mxu0 0.0
          %385 = vmatpush1.msra.mxu0 0.0
          %386 = vmatprep.subr.mxu0 0.0
          %387 = vmatpush1.msra.mxu0 0.0
          %388 = vmatprep.subr.mxu0 0.0
          %389 = vmatpush1.msra.mxu0 0.0
          %390 = vmatprep.subr.mxu0 0.0
          %391 = vmatpush1.msra.mxu0 0.0
          %392 = vmatprep.subr.mxu0 0.0
          %393 = vmatpush1.msra.mxu0 0.0
          %394 = vmatprep.subr.mxu0 0.0
          %395 = vmatpush1.msra.mxu0 0.0
          %396 = vmatprep.subr.mxu0 0.0
          %397 = vmatpush1.msra.mxu0 0.0
          %398 = vmatprep.subr.mxu0 0.0
          %399 = vmatpush1.msra.mxu0 0.0
          %400 = vmatprep.subr.mxu0 0.0
          %401 = vmatpush1.msra.mxu0 0.0
          %402 = vmatprep.mubr.f32.mxu0 0.0
          %403 = vmatmul.mubr.f32.gmra.mrb[0].mxu0 %v333
          %v404 = vpop.f32.mrb[0].mxu0
          %v405 = vadd.f32 %v329, %v404
          %v406 = vpop.f32.mrb[0].mxu0
          %407 = vdwg.mxu0
          %vm408 = vcmask 74752
          %409 = vst.msk [vmem:[#allocation8] sm:$0x3] %vm408, %v405
        $region52: #{tpu_custom_call.1} parent=31 // pred_fallthru
          _
        // Predicated region
        $region53: #{tpu_custom_call.1} parent=31 // pred_check
          %p410 = pneg %p119
        $region54: #{tpu_custom_call.1} parent=31 // pred_check_branch
          %412 = sbr.rel (%p410) target = $region56
        $region55: #{tpu_custom_call.1} parent=31 // pred_region
          %s414 = ssub.s32 32, 32
          %415 = vsyncadd [#allocation5], %s414
          %s416 = smul.addr %s23, 32
          %s417 = scalar_lea.hbm %s3, %s416
          %s419 = sshll.u32 [#allocation8], 4
          %s420 = int_to_ptr.vmem [resolvable:$true] %s419
          %422 = dma.vmem_to_hbm [thread:$0]  %s420, 32, %s417, [#allocation5]
        $region56: #{tpu_custom_call.1} parent=31 // pred_fallthru
          _
        // Predicated region
        $region57: #{tpu_custom_call.1} parent=31 // pred_check
          %p423 = pneg %p119
        $region58: #{tpu_custom_call.1} parent=31 // pred_check_branch
          %425 = sbr.rel (%p423) target = $region60
        $region59: #{tpu_custom_call.1} parent=31 // pred_region
          %426 = dma.done [#allocation5], 32
        $region60: #{tpu_custom_call.1} parent=31 // pred_fallthru
          _
      $region32: #{tpu_custom_call.1} parent=5 // pred_fallthru
        _
      %p427 = scmp.le.s32.totalorder 2, %s14
      // Predicated region
      $region61: #{tpu_custom_call.1} parent=5 // pred_check
        %p428 = pneg %p427
      $region62: #{tpu_custom_call.1} parent=5 // pred_check_branch
        %430 = sbr.rel (%p428) target = $region64
      $region63: #{tpu_custom_call.1} parent=5 // pred_region
        %s431 = ssub.s32 %s14, 2
      $region64: #{tpu_custom_call.1} parent=5 // pred_fallthru
        _
    $region6: #{tpu_custom_call.1} parent=1 // loop_footer
      %s18 = sadd.s32 1, %s14
    $region7: #{tpu_custom_call.1} parent=1 // loop_footer_branch
      %13 = sbr.rel target = $region3
    $region8: #{tpu_custom_call.1} parent=1 // loop_exit
      _
    %432 = vsyncpa [#allocation4], 1
    %s433 = scalar_lea.sflag [#allocation4], 1
    %434 = vsyncpa %s433, 1
    %435 = vsyncpa [#allocation7], 1
    %436 = vsyncpa [#allocation5], 1
    %s437 = scalar_lea.sflag [#allocation5], 1
    %438 = vsyncpa %s437, 1

</llo_original>
